<compile_context>
chip_gen: v6e
topology: v6e:2x2x1
jax: 0.10.0
libtpu: 0.0.40
codegen_flags: <defaults>
</compile_context>

<pallas_src>
import jax
import jax.numpy as jnp
from jax.experimental import pallas as pl
from jax.experimental.pallas import tpu as pltpu


def mlp_kernel(x_ref, w1_ref, b1_ref, w2_ref, b2_ref, o_ref):
    # dense1 on the MXU with f32 accumulation; bias + ReLU on the VPU.
    h = jnp.dot(x_ref[...], w1_ref[...], preferred_element_type=jnp.float32)
    h = jnp.maximum(h + b1_ref[...], 0.0)
    # dense2 (tiny N) + bias; the intermediate h never touches HBM.
    y = jnp.dot(h, w2_ref[...], preferred_element_type=jnp.float32)
    o_ref[...] = (y + b2_ref[...]).astype(o_ref.dtype)


def _block_diag(w, p):
    """(K, N) -> (p*K, p*N) block-diagonal matrix with p copies of w."""
    if p == 1:
        return w
    k, n = w.shape
    eye = jnp.eye(p, dtype=w.dtype)
    return (eye[:, None, :, None] * w[None, :, None, :]).reshape(p * k, p * n)


_MIN_TILE_ROWS = 1024
_MAX_TILE_ROWS = 8192      # 8192 * 128 lanes * 4 B = 4 MiB lane-padded block


def _pick_tile_rows(rows: int) -> int:
    """Rows per grid step: big enough to amortize per-step overhead, small
    enough for double-buffered VMEM on all chips, and >= ~4 grid steps for
    large inputs so the 'parallel' axis can feed both v7x TensorCores."""
    if rows <= _MIN_TILE_ROWS:
        return rows                                      # one full-extent block
    tile = min(_MAX_TILE_ROWS, max(_MIN_TILE_ROWS, -(-rows // 4)))
    return (tile // 8) * 8                               # sublane-aligned


def _mlp_pallas(x2d, w1, b1, w2, b2):
    rows, in_w = x2d.shape
    hid_w = w1.shape[1]
    out_w = w2.shape[1]

    tile = _pick_tile_rows(rows)
    # Partial final block instead of jnp.pad: rows are independent; OOB input
    # rows are garbage, their output rows are dropped by Pallas.
    grid = (pl.cdiv(rows, tile),)

    # VMEM budget: each (tile, width<=128) f32 block is lane-padded to 128
    # lanes -> tile*512 B per buffer (x + out double-buffered, plus the hidden
    # intermediate).  Keep the limit well below v7x's 64 MiB physical VMEM.
    block_bytes = tile * 128 * 4
    vmem_limit = int(min(48 * 1024 * 1024,
                         max(32 * 1024 * 1024, 10 * block_bytes)))

    cost = pl.CostEstimate(
        flops=2 * rows * in_w * hid_w + 2 * rows * hid_w * out_w,
        transcendentals=0,
        bytes_accessed=4 * (rows * in_w + rows * out_w
                            + in_w * hid_w + hid_w * out_w + hid_w + out_w),
    )

    return pl.pallas_call(
        mlp_kernel,
        out_shape=jax.ShapeDtypeStruct((rows, out_w), jnp.float32),
        grid_spec=pltpu.PrefetchScalarGridSpec(
            num_scalar_prefetch=0,
            grid=grid,
            in_specs=[
                # x tiles stream over the batch axis (double-buffered DMA).
                pl.BlockSpec((tile, in_w), lambda i: (i, 0)),
                # Weights / biases: constant index maps -> VMEM resident.
                pl.BlockSpec((in_w, hid_w), lambda i: (0, 0)),
                pl.BlockSpec((1, hid_w), lambda i: (0, 0)),
                pl.BlockSpec((hid_w, out_w), lambda i: (0, 0)),
                pl.BlockSpec((1, out_w), lambda i: (0, 0)),
            ],
            out_specs=pl.BlockSpec((tile, out_w), lambda i: (i, 0)),
        ),
        compiler_params=pltpu.CompilerParams(
            dimension_semantics=("parallel",),
            vmem_limit_bytes=vmem_limit,
        ),
        cost_estimate=cost,
    )(x2d, w1, b1, w2, b2)


@jax.jit
def mlp_forward(x, w1, b1, w2, b2):
    """relu(x @ w1 + b1) @ w2 + b2.

    Weights are stored transposed vs. PyTorch (w1: (n_features, 20),
    w2: (20, 2)); biases may be (H,) or (1, H).  The wrapper only performs
    free row-major reshapes -- no pad, no dtype cast, no slice, so no extra
    HBM pass over x.
    """
    batch, n_features = x.shape
    hidden = w1.shape[1]
    out_dim = w2.shape[1]
    b1 = b1.reshape(1, hidden)
    b2 = b2.reshape(1, out_dim)

    # Lane-dense packing factor: fold `pack` batch rows into one x row so the
    # kernel's x block fills (most of) the 128 lanes.  The x reshape is a free
    # contiguous bitcast; the (tiny) weights become block-diagonal so the
    # kernel body is identical.
    pack = 1
    if n_features < 128:
        pack = min(16, max(1, 128 // n_features))
        while pack > 1 and batch % pack != 0:
            pack //= 2

    if pack > 1:
        xk = x.reshape(batch // pack, pack * n_features)
        w1k = _block_diag(w1, pack)
        b1k = jnp.tile(b1, (1, pack))
        w2k = _block_diag(w2, pack)
        b2k = jnp.tile(b2, (1, pack))
    else:
        xk, w1k, b1k, w2k, b2k = x, w1, b1, w2, b2

    out = _mlp_pallas(xk, w1k, b1k, w2k, b2k)
    return out.reshape(batch, out_dim)


def reference_forward(x, w1, b1, w2, b2):
    h = jnp.maximum(x @ w1 + b1.reshape(1, -1), 0.0)
    return h @ w2 + b2.reshape(1, -1)


if __name__ == "__main__":
    n_features, hidden, out_dim = 32, 20, 2

    key = jax.random.PRNGKey(0)
    kx1, kx2, kx3, kw1, kb1, kw2, kb2 = jax.random.split(key, 7)

    # PyTorch-style uniform(-1/sqrt(fan_in), 1/sqrt(fan_in)) init.
    bound1 = float(1.0 / (n_features ** 0.5))
    w1 = jax.random.uniform(kw1, (n_features, hidden), jnp.float32, -bound1, bound1)
    b1 = jax.random.uniform(kb1, (hidden,), jnp.float32, -bound1, bound1)
    bound2 = float(1.0 / (hidden ** 0.5))
    w2 = jax.random.uniform(kw2, (hidden, out_dim), jnp.float32, -bound2, bound2)
    b2 = jax.random.uniform(kb2, (out_dim,), jnp.float32, -bound2, bound2)

    # (a) small batch -> packed (pack=4) single full-extent block.
    x_a = jax.random.normal(kx1, (8, n_features), jnp.float32)
    out_a = jax.block_until_ready(mlp_forward(x_a, w1, b1, w2, b2))
    assert out_a.shape == (8, out_dim), out_a.shape
    assert jnp.allclose(out_a, reference_forward(x_a, w1, b1, w2, b2),
                        atol=1e-5, rtol=1e-5), "mismatch (packed, single block)"

    # (b) odd batch -> unpacked fallback, 2-step grid with a partial last block.
    x_b = jax.random.normal(kx2, (1031, n_features), jnp.float32)
    out_b = jax.block_until_ready(mlp_forward(x_b, w1, b1, w2, b2))
    assert out_b.shape == (1031, out_dim), out_b.shape
    assert jnp.allclose(out_b, reference_forward(x_b, w1, b1, w2, b2),
                        atol=1e-5, rtol=1e-5), "mismatch (unpacked, partial block)"

    # (c) batch % 4 == 0 but rows % tile != 0 -> packed multi-step grid with a
    #     partial final block (no jnp.pad anywhere).
    x_c = jax.random.normal(kx3, (4100, n_features), jnp.float32)
    out_c = jax.block_until_ready(mlp_forward(x_c, w1, b1, w2, b2))
    assert out_c.shape == (4100, out_dim), out_c.shape
    assert jnp.allclose(out_c, reference_forward(x_c, w1, b1, w2, b2),
                        atol=1e-5, rtol=1e-5), "mismatch (packed, grid)"

    print("KERNEL_OK")
</pallas_src>

<mosaic_0001>
module attributes {stable_mosaic.version = 11 : i64} {
  func.func @mlp_kernel(%arg0: i32, %arg1: memref<2x128xf32, #tpu.memory_space<vmem>>, %arg2: memref<128x80xf32, #tpu.memory_space<vmem>>, %arg3: memref<1x80xf32, #tpu.memory_space<vmem>>, %arg4: memref<80x8xf32, #tpu.memory_space<vmem>>, %arg5: memref<1x8xf32, #tpu.memory_space<vmem>>, %arg6: memref<2x8xf32, #tpu.memory_space<vmem>>) attributes {dimension_semantics = [#tpu.dimension_semantics<parallel>], iteration_bounds = array<i64: 1>, scalar_prefetch = 0 : i64, scratch_operands = 0 : i64, tpu.core_type = #tpu.core_type<tc>, window_params = [{transform_indices = @transform_0, window_bounds = array<i64: 2, 128>}, {pipeline_mode = #tpu.pipeline_mode<synchronous>, transform_indices = @transform_1, window_bounds = array<i64: 128, 80>}, {pipeline_mode = #tpu.pipeline_mode<synchronous>, transform_indices = @transform_2, window_bounds = array<i64: 1, 80>}, {pipeline_mode = #tpu.pipeline_mode<synchronous>, transform_indices = @transform_3, window_bounds = array<i64: 80, 8>}, {pipeline_mode = #tpu.pipeline_mode<synchronous>, transform_indices = @transform_4, window_bounds = array<i64: 1, 8>}, {transform_indices = @transform_5, window_bounds = array<i64: 2, 8>}]} {
    %c0 = arith.constant 0 : index
    %c0_0 = arith.constant 0 : index
    %0 = vector.load %arg1[%c0, %c0_0] : memref<2x128xf32, #tpu.memory_space<vmem>>, vector<2x128xf32>
    %c0_1 = arith.constant 0 : index
    %c0_2 = arith.constant 0 : index
    %1 = vector.load %arg2[%c0_1, %c0_2] : memref<128x80xf32, #tpu.memory_space<vmem>>, vector<128x80xf32>
    %cst = arith.constant dense<0.000000e+00> : vector<2x80xf32>
    %2 = tpu.matmul %0, %1, %cst {dimension_numbers = #tpu.dot_dimension_numbers<[1], [0], [0], [1], [0, 0, 1, 1], [], []>} : vector<2x128xf32>, vector<128x80xf32>, vector<2x80xf32> -> vector<2x80xf32>
    %c0_3 = arith.constant 0 : index
    %c0_4 = arith.constant 0 : index
    %3 = vector.load %arg3[%c0_3, %c0_4] : memref<1x80xf32, #tpu.memory_space<vmem>>, vector<1x80xf32>
    %4 = vector.broadcast %3 : vector<1x80xf32> to vector<2x80xf32>
    %5 = arith.addf %2, %4 : vector<2x80xf32>
    %cst_5 = arith.constant 0.000000e+00 : f32
    %6 = vector.broadcast %cst_5 : f32 to vector<2x80xf32>
    %7 = arith.maximumf %5, %6 : vector<2x80xf32>
    %c0_6 = arith.constant 0 : index
    %c0_7 = arith.constant 0 : index
    %8 = vector.load %arg4[%c0_6, %c0_7] : memref<80x8xf32, #tpu.memory_space<vmem>>, vector<80x8xf32>
    %cst_8 = arith.constant dense<0.000000e+00> : vector<2x8xf32>
    %9 = tpu.matmul %7, %8, %cst_8 {dimension_numbers = #tpu.dot_dimension_numbers<[1], [0], [0], [1], [0, 0, 1, 1], [], []>} : vector<2x80xf32>, vector<80x8xf32>, vector<2x8xf32> -> vector<2x8xf32>
    %c0_9 = arith.constant 0 : index
    %c0_10 = arith.constant 0 : index
    %10 = vector.load %arg5[%c0_9, %c0_10] : memref<1x8xf32, #tpu.memory_space<vmem>>, vector<1x8xf32>
    %11 = vector.broadcast %10 : vector<1x8xf32> to vector<2x8xf32>
    %12 = arith.addf %9, %11 : vector<2x8xf32>
    %c0_11 = arith.constant 0 : index
    %c0_12 = arith.constant 0 : index
    %13 = vector.load %arg6[%c0_11, %c0_12] : memref<2x8xf32, #tpu.memory_space<vmem>>, vector<2x8xf32>
    tpu.vector_store %arg6[%c0_11, %c0_12], %12 {strides = array<i32>} : memref<2x8xf32, #tpu.memory_space<vmem>>, vector<2x8xf32>,
    return
  }
  func.func @transform_0(%arg0: i32) -> (i32, i32) {
    %c0_i32 = arith.constant 0 : i32
    %c0_i32_0 = arith.constant 0 : i32
    return %arg0, %c0_i32 : i32, i32
  }
  func.func @transform_1(%arg0: i32) -> (i32, i32) {
    %c0_i32 = arith.constant 0 : i32
    %c0_i32_0 = arith.constant 0 : i32
    %c0_i32_1 = arith.constant 0 : i32
    return %c0_i32, %c0_i32_0 : i32, i32
  }
  func.func @transform_2(%arg0: i32) -> (i32, i32) {
    %c0_i32 = arith.constant 0 : i32
    %c0_i32_0 = arith.constant 0 : i32
    %c0_i32_1 = arith.constant 0 : i32
    return %c0_i32, %c0_i32_0 : i32, i32
  }
  func.func @transform_3(%arg0: i32) -> (i32, i32) {
    %c0_i32 = arith.constant 0 : i32
    %c0_i32_0 = arith.constant 0 : i32
    %c0_i32_1 = arith.constant 0 : i32
    return %c0_i32, %c0_i32_0 : i32, i32
  }
  func.func @transform_4(%arg0: i32) -> (i32, i32) {
    %c0_i32 = arith.constant 0 : i32
    %c0_i32_0 = arith.constant 0 : i32
    %c0_i32_1 = arith.constant 0 : i32
    return %c0_i32, %c0_i32_0 : i32, i32
  }
  func.func @transform_5(%arg0: i32) -> (i32, i32) {
    %c0_i32 = arith.constant 0 : i32
    %c0_i32_0 = arith.constant 0 : i32
    return %arg0, %c0_i32 : i32, i32
  }
}

</mosaic_0001>

<llo_original>
// kernel: mlp_forward.1
$region0: #{mlp_forward.1}
  #allocation0 [shape = 'u32[]', space=smem, size = 0x4, offset = 0x4, fixed_abs, tag = 'smem constant byte address 0x4 - core index']
  #allocation1 [shape = 'u32[144,128]{1,0:T(1,128)}', space=vmem, size = 0x12000, scoped, tag = 'internal scratch']
  %s0 = inlined_call_operand.vmem [shape: f32[2,128], index: 0, kind: input, shape index: {}]
  %s1 = inlined_call_operand.vmem [shape: f32[128,80], index: 1, kind: input, shape index: {}]
  %s2 = inlined_call_operand.vmem [shape: f32[1,80], index: 2, kind: input, shape index: {}]
  %s3 = inlined_call_operand.vmem [shape: f32[80,8], index: 3, kind: input, shape index: {}]
  %s4 = inlined_call_operand.vmem [shape: f32[1,8], index: 4, kind: input, shape index: {}]
  %s5 = inlined_call_operand.vmem [shape: f32[2,8], index: 5, kind: output, shape index: {}]
  %s6 = sld [smem:[#allocation0]]
  $region30: #{mlp_forward.1} parent=0
    _
  %s8 = ssub.s32 1, %s6
  %s9 = scalar_select 0, %s8, %s6
  // Predicated region
  $region2: #{mlp_forward.1} parent=0 // pred_check
    _
  $region3: #{mlp_forward.1} parent=0 // pred_check_branch
    %11 = sbr.rel (0) target = $region5
  $region4: #{mlp_forward.1} parent=0 // pred_region
    _
  $region5: #{mlp_forward.1} parent=0 // pred_fallthru
    _
  // Predicated region
  $region6: #{mlp_forward.1} parent=0 // pred_check
    _
  $region7: #{mlp_forward.1} parent=0 // pred_check_branch
    %13 = sbr.rel (0) target = $region9
  $region8: #{mlp_forward.1} parent=0 // pred_region
    _
  $region9: #{mlp_forward.1} parent=0 // pred_fallthru
    _
  // Predicated region
  $region10: #{mlp_forward.1} parent=0 // pred_check
    _
  $region11: #{mlp_forward.1} parent=0 // pred_check_branch
    %15 = sbr.rel (0) target = $region13
  $region12: #{mlp_forward.1} parent=0 // pred_region
    _
  $region13: #{mlp_forward.1} parent=0 // pred_fallthru
    _
  // Predicated region
  $region14: #{mlp_forward.1} parent=0 // pred_check
    _
  $region15: #{mlp_forward.1} parent=0 // pred_check_branch
    %17 = sbr.rel (0) target = $region17
  $region16: #{mlp_forward.1} parent=0 // pred_region
    _
  $region17: #{mlp_forward.1} parent=0 // pred_fallthru
    _
  // Predicated region
  $region18: #{mlp_forward.1} parent=0 // pred_check
    _
  $region19: #{mlp_forward.1} parent=0 // pred_check_branch
    %19 = sbr.rel (0) target = $region21
  $region20: #{mlp_forward.1} parent=0 // pred_region
    _
  $region21: #{mlp_forward.1} parent=0 // pred_fallthru
    _
  %v20 = vld [vmem:[%s0] sm:$0x3]
  %v21 = vld [vmem:[%s1] sm:$0xff]
  %v22 = vld [vmem:[%s1 + $0x8] sm:$0xff]
  %v23 = vld [vmem:[%s1 + $0x10] sm:$0xff]
  %v24 = vld [vmem:[%s1 + $0x18] sm:$0xff]
  %v25 = vld [vmem:[%s1 + $0x20] sm:$0xff]
  %v26 = vld [vmem:[%s1 + $0x28] sm:$0xff]
  %v27 = vld [vmem:[%s1 + $0x30] sm:$0xff]
  %v28 = vld [vmem:[%s1 + $0x38] sm:$0xff]
  %v29 = vld [vmem:[%s1 + $0x40] sm:$0xff]
  %v30 = vld [vmem:[%s1 + $0x48] sm:$0xff]
  %v31 = vld [vmem:[%s1 + $0x50] sm:$0xff]
  %v32 = vld [vmem:[%s1 + $0x58] sm:$0xff]
  %v33 = vld [vmem:[%s1 + $0x60] sm:$0xff]
  %v34 = vld [vmem:[%s1 + $0x68] sm:$0xff]
  %v35 = vld [vmem:[%s1 + $0x70] sm:$0xff]
  %v36 = vld [vmem:[%s1 + $0x78] sm:$0xff]
  %v37 = vld [vmem:[%s2] sm:$0x1]
  %v39 = vlaneseq
  %v40 = vshrl.u32 %v39, 7
  %v41 = vsub.s32 0, %v40
  %v42 = vrot.slane %v37, %v41
  %44 = vmatprep.subr.mxu0 0.0
  %45 = vmatpush1.msra.mxu0 %v36
  %46 = vmatprep.subr.mxu0 0.0
  %47 = vmatpush1.msra.mxu0 %v35
  %48 = vmatprep.subr.mxu0 0.0
  %49 = vmatpush1.msra.mxu0 %v34
  %50 = vmatprep.subr.mxu0 0.0
  %51 = vmatpush1.msra.mxu0 %v33
  %52 = vmatprep.subr.mxu0 0.0
  %53 = vmatpush1.msra.mxu0 %v32
  %54 = vmatprep.subr.mxu0 0.0
  %55 = vmatpush1.msra.mxu0 %v31
  %56 = vmatprep.subr.mxu0 0.0
  %57 = vmatpush1.msra.mxu0 %v30
  %58 = vmatprep.subr.mxu0 0.0
  %59 = vmatpush1.msra.mxu0 %v29
  %60 = vmatprep.subr.mxu0 0.0
  %61 = vmatpush1.msra.mxu0 %v28
  %62 = vmatprep.subr.mxu0 0.0
  %63 = vmatpush1.msra.mxu0 %v27
  %64 = vmatprep.subr.mxu0 0.0
  %65 = vmatpush1.msra.mxu0 %v26
  %66 = vmatprep.subr.mxu0 0.0
  %67 = vmatpush1.msra.mxu0 %v25
  %68 = vmatprep.subr.mxu0 0.0
  %69 = vmatpush1.msra.mxu0 %v24
  %70 = vmatprep.subr.mxu0 0.0
  %71 = vmatpush1.msra.mxu0 %v23
  %72 = vmatprep.subr.mxu0 0.0
  %73 = vmatpush1.msra.mxu0 %v22
  %74 = vmatprep.subr.mxu0 0.0
  %75 = vmatpush1.msra.mxu0 %v21
  %76 = vmatprep.subr.mxu0 0.0
  %77 = vmatpush2.msra.mxu0 0.0
  %78 = vmatprep.subr.mxu0 0.0
  %79 = vmatpush2.msra.mxu0 0.0
  %80 = vmatprep.subr.mxu0 0.0
  %81 = vmatpush2.msra.mxu0 0.0
  %82 = vmatprep.subr.mxu0 0.0
  %83 = vmatpush2.msra.mxu0 0.0
  %84 = vmatprep.subr.mxu0 0.0
  %85 = vmatpush2.msra.mxu0 0.0
  %86 = vmatprep.subr.mxu0 0.0
  %87 = vmatpush2.msra.mxu0 0.0
  %88 = vmatprep.subr.mxu0 0.0
  %89 = vmatpush2.msra.mxu0 0.0
  %90 = vmatprep.subr.mxu0 0.0
  %91 = vmatpush2.msra.mxu0 0.0
  %92 = vmatprep.subr.mxu0 0.0
  %93 = vmatpush2.msra.mxu0 0.0
  %94 = vmatprep.subr.mxu0 0.0
  %95 = vmatpush2.msra.mxu0 0.0
  %96 = vmatprep.subr.mxu0 0.0
  %97 = vmatpush2.msra.mxu0 0.0
  %98 = vmatprep.subr.mxu0 0.0
  %99 = vmatpush2.msra.mxu0 0.0
  %100 = vmatprep.subr.mxu0 0.0
  %101 = vmatpush2.msra.mxu0 0.0
  %102 = vmatprep.subr.mxu0 0.0
  %103 = vmatpush2.msra.mxu0 0.0
  %104 = vmatprep.subr.mxu0 0.0
  %105 = vmatpush2.msra.mxu0 0.0
  %106 = vmatprep.subr.mxu0 0.0
  %107 = vmatpush2.msra.mxu0 0.0
  %108 = vmatprep.mubr.f32.mxu0 0.0
  %109 = vmatmul.mubr.f32.gmra.mxu0 %v20
  %v110 = vpop.f32.mrf.mxu0
  %v111 = vadd.f32 %v42, %v110
  %v112 = vpop.f32.mrf.mxu0
  %113 = vdwg.mxu0
  %v114 = vmax.f32 %v111, 0.0
  %v115 = vld [vmem:[%s3] sm:$0xff]
  %v116 = vld [vmem:[%s3 + $0x8] sm:$0xff]
  %v117 = vld [vmem:[%s3 + $0x10] sm:$0xff]
  %v118 = vld [vmem:[%s3 + $0x18] sm:$0xff]
  %v119 = vld [vmem:[%s3 + $0x20] sm:$0xff]
  %v120 = vld [vmem:[%s3 + $0x28] sm:$0xff]
  %v121 = vld [vmem:[%s3 + $0x30] sm:$0xff]
  %v122 = vld [vmem:[%s3 + $0x38] sm:$0xff]
  %v123 = vld [vmem:[%s3 + $0x40] sm:$0xff]
  %v124 = vld [vmem:[%s3 + $0x48] sm:$0xff]
  %v125 = vld [vmem:[%s4] sm:$0x1]
  %v127 = vlaneseq
  %v128 = vshrl.u32 %v127, 7
  %v129 = vsub.s32 0, %v128
  %v130 = vrot.slane %v125, %v129
  %vm132 = vcmask 654336
  %v134 = vsel %vm132, %v114, 0
  %136 = vmatprep.subr.mxu0 0.0
  %137 = vmatpush1.msra.mxu0 0.0
  %138 = vmatprep.subr.mxu0 0.0
  %139 = vmatpush1.msra.mxu0 0.0
  %140 = vmatprep.subr.mxu0 0.0
  %141 = vmatpush1.msra.mxu0 0.0
  %142 = vmatprep.subr.mxu0 0.0
  %143 = vmatpush1.msra.mxu0 0.0
  %144 = vmatprep.subr.mxu0 0.0
  %145 = vmatpush1.msra.mxu0 0.0
  %146 = vmatprep.subr.mxu0 0.0
  %147 = vmatpush1.msra.mxu0 0.0
  %148 = vmatprep.subr.mxu0 0.0
  %149 = vmatpush1.msra.mxu0 %v124
  %150 = vmatprep.subr.mxu0 0.0
  %151 = vmatpush1.msra.mxu0 %v123
  %152 = vmatprep.subr.mxu0 0.0
  %153 = vmatpush1.msra.mxu0 %v122
  %154 = vmatprep.subr.mxu0 0.0
  %155 = vmatpush1.msra.mxu0 %v121
  %156 = vmatprep.subr.mxu0 0.0
  %157 = vmatpush1.msra.mxu0 %v120
  %158 = vmatprep.subr.mxu0 0.0
  %159 = vmatpush1.msra.mxu0 %v119
  %160 = vmatprep.subr.mxu0 0.0
  %161 = vmatpush1.msra.mxu0 %v118
  %162 = vmatprep.subr.mxu0 0.0
  %163 = vmatpush1.msra.mxu0 %v117
  %164 = vmatprep.subr.mxu0 0.0
  %165 = vmatpush1.msra.mxu0 %v116
  %166 = vmatprep.subr.mxu0 0.0
  %167 = vmatpush1.msra.mxu0 %v115
  %168 = vmatprep.subr.mxu0 0.0
  %169 = vmatpush2.msra.mxu0 0.0
  %170 = vmatprep.subr.mxu0 0.0
  %171 = vmatpush2.msra.mxu0 0.0
  %172 = vmatprep.subr.mxu0 0.0
  %173 = vmatpush2.msra.mxu0 0.0
  %174 = vmatprep.subr.mxu0 0.0
  %175 = vmatpush2.msra.mxu0 0.0
  %176 = vmatprep.subr.mxu0 0.0
  %177 = vmatpush2.msra.mxu0 0.0
  %178 = vmatprep.subr.mxu0 0.0
  %179 = vmatpush2.msra.mxu0 0.0
  %180 = vmatprep.subr.mxu0 0.0
  %181 = vmatpush2.msra.mxu0 0.0
  %182 = vmatprep.subr.mxu0 0.0
  %183 = vmatpush2.msra.mxu0 0.0
  %184 = vmatprep.subr.mxu0 0.0
  %185 = vmatpush2.msra.mxu0 0.0
  %186 = vmatprep.subr.mxu0 0.0
  %187 = vmatpush2.msra.mxu0 0.0
  %188 = vmatprep.subr.mxu0 0.0
  %189 = vmatpush2.msra.mxu0 0.0
  %190 = vmatprep.subr.mxu0 0.0
  %191 = vmatpush2.msra.mxu0 0.0
  %192 = vmatprep.subr.mxu0 0.0
  %193 = vmatpush2.msra.mxu0 0.0
  %194 = vmatprep.subr.mxu0 0.0
  %195 = vmatpush2.msra.mxu0 0.0
  %196 = vmatprep.subr.mxu0 0.0
  %197 = vmatpush2.msra.mxu0 0.0
  %198 = vmatprep.subr.mxu0 0.0
  %199 = vmatpush2.msra.mxu0 0.0
  %200 = vmatprep.mubr.f32.mxu0 0.0
  %201 = vmatmul.mubr.f32.gmra.mxu0 %v134
  %v202 = vpop.f32.mrf.mxu0
  %v203 = vadd.f32 %v130, %v202
  %v204 = vpop.f32.mrf.mxu0
  %205 = vdwg.mxu0
  %vm206 = vcmask 58368
  %207 = vst.msk [vmem:[%s5] sm:$0x3] %vm206, %v203
  // Predicated region
  $region22: #{mlp_forward.1} parent=0 // pred_check
    _
  $region23: #{mlp_forward.1} parent=0 // pred_check_branch
    %209 = sbr.rel (0) target = $region25
  $region24: #{mlp_forward.1} parent=0 // pred_region
    _
  $region25: #{mlp_forward.1} parent=0 // pred_fallthru
    _
  // Predicated region
  $region26: #{mlp_forward.1} parent=0 // pred_check
    _
  $region27: #{mlp_forward.1} parent=0 // pred_check_branch
    %211 = sbr.rel (0) target = $region29
  $region28: #{mlp_forward.1} parent=0 // pred_region
    _
  $region29: #{mlp_forward.1} parent=0 // pred_fallthru
    _

</llo_original>
